<compile_context>
chip_gen: v7x
topology: tpu7x:2x2x1
jax: 0.10.0
libtpu: 0.0.40
codegen_flags: <defaults>
</compile_context>

<pallas_src>
import functools

import jax
import jax.numpy as jnp
from jax.experimental import pallas as pl
from jax.experimental.pallas import tpu as pltpu


def _relu6(x):
    return jnp.clip(x, 0.0, 6.0)


def _mbconv_residual_kernel(x_ref, w1_ref, b1_ref, wdw_ref, bdw_ref,
                            w2_ref, b2_ref, m_ref, o_ref, acc_ref, *,
                            W, add_residual, mxu_dtype):
    e_idx = pl.program_id(1)
    n_e = pl.num_programs(1)
    HW = x_ref.shape[2]

    x = x_ref[0].astype(jnp.float32)                               # (C, HW)

    # ---- 1x1 expand (pointwise conv == matmul over channels) + ReLU6 ----
    h = jnp.dot(w1_ref[...].astype(mxu_dtype), x.astype(mxu_dtype),
                preferred_element_type=jnp.float32) + b1_ref[...]  # (E_blk, HW)
    h = _relu6(h)

    # ---- 3x3 depthwise conv, stride 1, pad 1: roll (XLU) + boundary masks ----
    wdw = wdw_ref[...]                                             # (E_blk, 9), hoisted
    masks = m_ref[...]                                             # (9, HW) static masks
    dw = h * wdw[:, 4:5] + bdw_ref[...]                            # center tap, bias folded
    for k in (0, 1, 2, 3, 5, 6, 7, 8):
        oy, ox = k // 3 - 1, k % 3 - 1
        s = oy * W + ox                                            # tap[f] = h[f + s]
        tap = pltpu.roll(h, (-s) % HW, axis=1) * masks[k:k + 1, :]
        dw = dw + tap * wdw[:, k:k + 1]
    dw = _relu6(dw)                                                # (E_blk, HW)

    # ---- 1x1 project (linear): partial contraction over this E-block ----
    part = jnp.dot(w2_ref[0].astype(mxu_dtype), dw.astype(mxu_dtype),
                   preferred_element_type=jnp.float32)             # (C, HW)

    @pl.when(e_idx == 0)
    def _():
        acc_ref[...] = part

    @pl.when(e_idx > 0)
    def _():
        acc_ref[...] += part

    @pl.when(e_idx == n_e - 1)
    def _():
        out = acc_ref[...] + b2_ref[...]
        if add_residual:                                           # shortcut = Identity
            out = out + x
        o_ref[0] = out.astype(o_ref.dtype)                         # lane-dense (C, HW) store


def residual_block(x_nchw, params, *, has_conv=True, has_shortcut=True,
                   e_block=None, mxu_dtype=jnp.float32):
    """Pallas implementation of ResidualBlock.forward (MBConv conv + Identity shortcut)."""
    if not has_conv:
        return x_nchw                                              # conv is None -> res = x

    N, C, H, W = x_nchw.shape
    E = params["w1"].shape[0]
    HW = H * W
    if e_block is None:
        e_block = E
    assert E % e_block == 0 and (e_block == E or e_block % 8 == 0)
    n_e = E // e_block

    # NCHW -> (N, C, H*W): pure reshape, no transpose.
    x2 = x_nchw.reshape(N, C, HW)
    w1 = params["w1"]                                              # (E, C)
    b1 = params["b1"].reshape(E, 1)
    wdw = params["wdw"].reshape(E, 9)
    bdw = params["bdw"].reshape(E, 1)
    w2b = params["w2"].reshape(C, n_e, e_block).transpose(1, 0, 2)  # (n_e, C, E_blk)
    b2 = params["b2"].reshape(C, 1)

    # Static boundary masks for the 9 depthwise taps in flattened-HW layout.
    ry = jnp.arange(H)[:, None]
    rx = jnp.arange(W)[None, :]
    mrows = []
    for k in range(9):
        oy, ox = k // 3 - 1, k % 3 - 1
        m = (ry + oy >= 0) & (ry + oy < H) & (rx + ox >= 0) & (rx + ox < W)
        mrows.append(m.reshape(1, HW))
    masks = jnp.concatenate(mrows, axis=0).astype(jnp.float32)      # (9, HW)

    kernel = functools.partial(_mbconv_residual_kernel, W=W,
                               add_residual=has_shortcut, mxu_dtype=mxu_dtype)

    flops = 2 * N * HW * E * (2 * C + 9)
    bytes_accessed = 4 * (2 * N * C * HW + w1.size + b1.size + wdw.size
                          + bdw.size + w2b.size + b2.size + masks.size)

    out = pl.pallas_call(
        kernel,
        out_shape=jax.ShapeDtypeStruct((N, C, HW), x_nchw.dtype),
        grid_spec=pltpu.PrefetchScalarGridSpec(
            num_scalar_prefetch=0,
            grid=(N, n_e),                                          # E-blocks = reduction axis
            in_specs=[
                pl.BlockSpec((1, C, HW), lambda n, e: (n, 0, 0)),      # x (resident across e)
                pl.BlockSpec((e_block, C), lambda n, e: (e, 0)),       # w1 block
                pl.BlockSpec((e_block, 1), lambda n, e: (e, 0)),       # b1 block
                pl.BlockSpec((e_block, 9), lambda n, e: (e, 0)),       # depthwise weights
                pl.BlockSpec((e_block, 1), lambda n, e: (e, 0)),       # depthwise bias
                pl.BlockSpec((1, C, e_block), lambda n, e: (e, 0, 0)),  # w2 block (pre-blocked)
                pl.BlockSpec((C, 1), lambda n, e: (0, 0)),             # b2
                pl.BlockSpec((9, HW), lambda n, e: (0, 0)),            # tap masks
            ],
            out_specs=pl.BlockSpec((1, C, HW), lambda n, e: (n, 0, 0)),
            scratch_shapes=[pltpu.VMEM((C, HW), jnp.float32)],         # f32 project accumulator
        ),
        compiler_params=pltpu.CompilerParams(
            dimension_semantics=("parallel", "arbitrary"),
            vmem_limit_bytes=32 * 1024 * 1024),
        cost_estimate=pl.CostEstimate(flops=flops, transcendentals=0,
                                      bytes_accessed=bytes_accessed),
    )(x2, w1, b1, wdw, bdw, w2b, b2, masks)

    return out.reshape(N, C, H, W)


def reference(x, params, *, add_residual=True):
    """Pure-JAX reference (NCHW, f32) for correctness checking."""
    N, C, H, W = x.shape
    h = jnp.einsum("ec,nchw->nehw", params["w1"], x, precision="highest")
    h = jnp.clip(h + params["b1"][None, :, None, None], 0.0, 6.0)
    hpad = jnp.pad(h, ((0, 0), (0, 0), (1, 1), (1, 1)))
    acc = jnp.zeros_like(h)
    for ky in range(3):
        for kx in range(3):
            acc = acc + hpad[:, :, ky:ky + H, kx:kx + W] \
                * params["wdw"][None, :, ky, kx, None, None]
    acc = jnp.clip(acc + params["bdw"][None, :, None, None], 0.0, 6.0)
    out = jnp.einsum("ce,nehw->nchw", params["w2"], acc, precision="highest")
    out = out + params["b2"][None, :, None, None]
    if add_residual:
        out = out + x
    return out


def init_params(key, C, expand_ratio=4):
    E = C * expand_ratio
    ks = jax.random.split(key, 6)
    s = 0.2
    return {
        "w1":  s * jax.random.normal(ks[0], (E, C), jnp.float32),    # 1x1 expand (out, in)
        "b1":  s * jax.random.normal(ks[1], (E,), jnp.float32),
        "wdw": s * jax.random.normal(ks[2], (E, 3, 3), jnp.float32),  # depthwise (ch, ky, kx)
        "bdw": s * jax.random.normal(ks[3], (E,), jnp.float32),
        "w2":  s * jax.random.normal(ks[4], (C, E), jnp.float32),    # 1x1 project (out, in)
        "b2":  s * jax.random.normal(ks[5], (C,), jnp.float32),
    }


if __name__ == "__main__":
    key = jax.random.PRNGKey(0)
    kx, kp = jax.random.split(key)

    N, C, H, W = 2, 4, 16, 16
    x = jax.random.normal(kx, (N, C, H, W), jnp.float32)             # NCHW like PyTorch
    params = init_params(kp, C, expand_ratio=4)

    # e_block=8 -> 2 reduction steps per image: exercises the accumulator path.
    out = residual_block(x, params, has_conv=True, has_shortcut=True, e_block=8)
    out = jax.block_until_ready(out)

    ref = reference(x, params, add_residual=True)
    assert out.shape == (N, C, H, W)
    max_err = float(jnp.max(jnp.abs(out - ref)))
    assert jnp.allclose(out, ref, atol=1e-3, rtol=1e-3), f"mismatch vs reference ({max_err})"

    print("KERNEL_OK")
</pallas_src>

<mosaic_0001>
module attributes {stable_mosaic.version = 11 : i64} {
  func.func @_mbconv_residual_kernel(%arg0: i32, %arg1: i32, %arg2: memref<1x4x256xf32, #tpu.memory_space<vmem>>, %arg3: memref<8x4xf32, #tpu.memory_space<vmem>>, %arg4: memref<8x1xf32, #tpu.memory_space<vmem>>, %arg5: memref<8x9xf32, #tpu.memory_space<vmem>>, %arg6: memref<8x1xf32, #tpu.memory_space<vmem>>, %arg7: memref<1x4x8xf32, #tpu.memory_space<vmem>>, %arg8: memref<4x1xf32, #tpu.memory_space<vmem>>, %arg9: memref<9x256xf32, #tpu.memory_space<vmem>>, %arg10: memref<1x4x256xf32, #tpu.memory_space<vmem>>, %arg11: memref<4x256xf32, #tpu.memory_space<vmem>>) attributes {dimension_semantics = [#tpu.dimension_semantics<parallel>, #tpu.dimension_semantics<arbitrary>], iteration_bounds = array<i64: 2, 2>, scalar_prefetch = 0 : i64, scratch_operands = 1 : i64, tpu.core_type = #tpu.core_type<tc>, window_params = [{transform_indices = @transform_0, window_bounds = array<i64: 1, 4, 256>}, {transform_indices = @transform_1, window_bounds = array<i64: 8, 4>}, {transform_indices = @transform_2, window_bounds = array<i64: 8, 1>}, {transform_indices = @transform_3, window_bounds = array<i64: 8, 9>}, {transform_indices = @transform_4, window_bounds = array<i64: 8, 1>}, {transform_indices = @transform_5, window_bounds = array<i64: 1, 4, 8>}, {pipeline_mode = #tpu.pipeline_mode<synchronous>, transform_indices = @transform_6, window_bounds = array<i64: 4, 1>}, {pipeline_mode = #tpu.pipeline_mode<synchronous>, transform_indices = @transform_7, window_bounds = array<i64: 9, 256>}, {transform_indices = @transform_8, window_bounds = array<i64: 1, 4, 256>}]} {
    %c0 = arith.constant 0 : index
    %c0_0 = arith.constant 0 : index
    %c0_1 = arith.constant 0 : index
    %0 = vector.load %arg2[%c0, %c0_0, %c0_1] : memref<1x4x256xf32, #tpu.memory_space<vmem>>, vector<1x4x256xf32>
    %1 = vector.shape_cast %0 : vector<1x4x256xf32> to vector<4x256xf32>
    %c0_2 = arith.constant 0 : index
    %c0_3 = arith.constant 0 : index
    %2 = vector.load %arg3[%c0_2, %c0_3] : memref<8x4xf32, #tpu.memory_space<vmem>>, vector<8x4xf32>
    %cst = arith.constant dense<0.000000e+00> : vector<8x256xf32>
    %3 = tpu.matmul %2, %1, %cst {dimension_numbers = #tpu.dot_dimension_numbers<[1], [0], [0], [1], [0, 0, 1, 1], [], []>} : vector<8x4xf32>, vector<4x256xf32>, vector<8x256xf32> -> vector<8x256xf32>
    %c0_4 = arith.constant 0 : index
    %c0_5 = arith.constant 0 : index
    %4 = vector.load %arg4[%c0_4, %c0_5] : memref<8x1xf32, #tpu.memory_space<vmem>>, vector<8x1xf32>
    %5 = vector.broadcast %4 : vector<8x1xf32> to vector<8x256xf32>
    %6 = arith.addf %3, %5 : vector<8x256xf32>
    %cst_6 = arith.constant 0.000000e+00 : f32
    %cst_7 = arith.constant 6.000000e+00 : f32
    %7 = vector.broadcast %cst_6 : f32 to vector<8x256xf32>
    %8 = arith.maximumf %7, %6 : vector<8x256xf32>
    %9 = vector.broadcast %cst_7 : f32 to vector<8x256xf32>
    %10 = arith.minimumf %9, %8 : vector<8x256xf32>
    %c0_8 = arith.constant 0 : index
    %c0_9 = arith.constant 0 : index
    %11 = vector.load %arg5[%c0_8, %c0_9] : memref<8x9xf32, #tpu.memory_space<vmem>>, vector<8x9xf32>
    %c0_10 = arith.constant 0 : index
    %c0_11 = arith.constant 0 : index
    %12 = vector.load %arg9[%c0_10, %c0_11] : memref<9x256xf32, #tpu.memory_space<vmem>>, vector<9x256xf32>
    %13 = vector.extract_strided_slice %11 {offsets = [0, 4], sizes = [8, 1], strides = [1, 1]} : vector<8x9xf32> to vector<8x1xf32>
    %14 = vector.broadcast %13 : vector<8x1xf32> to vector<8x256xf32>
    %15 = arith.mulf %10, %14 : vector<8x256xf32>
    %c0_12 = arith.constant 0 : index
    %c0_13 = arith.constant 0 : index
    %16 = vector.load %arg6[%c0_12, %c0_13] : memref<8x1xf32, #tpu.memory_space<vmem>>, vector<8x1xf32>
    %17 = vector.broadcast %16 : vector<8x1xf32> to vector<8x256xf32>
    %18 = arith.addf %15, %17 : vector<8x256xf32>
    %c17_i32 = arith.constant 17 : i32
    %19 = tpu.dynamic_rotate %10 by %c17_i32 dim 1 : vector<8x256xf32>, i32 -> vector<8x256xf32>
    %20 = vector.extract_strided_slice %12 {offsets = [0, 0], sizes = [1, 256], strides = [1, 1]} : vector<9x256xf32> to vector<1x256xf32>
    %21 = vector.broadcast %20 : vector<1x256xf32> to vector<8x256xf32>
    %22 = arith.mulf %19, %21 : vector<8x256xf32>
    %23 = vector.extract_strided_slice %11 {offsets = [0, 0], sizes = [8, 1], strides = [1, 1]} : vector<8x9xf32> to vector<8x1xf32>
    %24 = vector.broadcast %23 : vector<8x1xf32> to vector<8x256xf32>
    %25 = arith.mulf %22, %24 : vector<8x256xf32>
    %26 = arith.addf %18, %25 : vector<8x256xf32>
    %c16_i32 = arith.constant 16 : i32
    %27 = tpu.dynamic_rotate %10 by %c16_i32 dim 1 : vector<8x256xf32>, i32 -> vector<8x256xf32>
    %28 = vector.extract_strided_slice %12 {offsets = [1, 0], sizes = [1, 256], strides = [1, 1]} : vector<9x256xf32> to vector<1x256xf32>
    %29 = vector.broadcast %28 : vector<1x256xf32> to vector<8x256xf32>
    %30 = arith.mulf %27, %29 : vector<8x256xf32>
    %31 = vector.extract_strided_slice %11 {offsets = [0, 1], sizes = [8, 1], strides = [1, 1]} : vector<8x9xf32> to vector<8x1xf32>
    %32 = vector.broadcast %31 : vector<8x1xf32> to vector<8x256xf32>
    %33 = arith.mulf %30, %32 : vector<8x256xf32>
    %34 = arith.addf %26, %33 : vector<8x256xf32>
    %c15_i32 = arith.constant 15 : i32
    %35 = tpu.dynamic_rotate %10 by %c15_i32 dim 1 : vector<8x256xf32>, i32 -> vector<8x256xf32>
    %36 = vector.extract_strided_slice %12 {offsets = [2, 0], sizes = [1, 256], strides = [1, 1]} : vector<9x256xf32> to vector<1x256xf32>
    %37 = vector.broadcast %36 : vector<1x256xf32> to vector<8x256xf32>
    %38 = arith.mulf %35, %37 : vector<8x256xf32>
    %39 = vector.extract_strided_slice %11 {offsets = [0, 2], sizes = [8, 1], strides = [1, 1]} : vector<8x9xf32> to vector<8x1xf32>
    %40 = vector.broadcast %39 : vector<8x1xf32> to vector<8x256xf32>
    %41 = arith.mulf %38, %40 : vector<8x256xf32>
    %42 = arith.addf %34, %41 : vector<8x256xf32>
    %c1_i32 = arith.constant 1 : i32
    %43 = tpu.dynamic_rotate %10 by %c1_i32 dim 1 : vector<8x256xf32>, i32 -> vector<8x256xf32>
    %44 = vector.extract_strided_slice %12 {offsets = [3, 0], sizes = [1, 256], strides = [1, 1]} : vector<9x256xf32> to vector<1x256xf32>
    %45 = vector.broadcast %44 : vector<1x256xf32> to vector<8x256xf32>
    %46 = arith.mulf %43, %45 : vector<8x256xf32>
    %47 = vector.extract_strided_slice %11 {offsets = [0, 3], sizes = [8, 1], strides = [1, 1]} : vector<8x9xf32> to vector<8x1xf32>
    %48 = vector.broadcast %47 : vector<8x1xf32> to vector<8x256xf32>
    %49 = arith.mulf %46, %48 : vector<8x256xf32>
    %50 = arith.addf %42, %49 : vector<8x256xf32>
    %c255_i32 = arith.constant 255 : i32
    %51 = tpu.dynamic_rotate %10 by %c255_i32 dim 1 : vector<8x256xf32>, i32 -> vector<8x256xf32>
    %52 = vector.extract_strided_slice %12 {offsets = [5, 0], sizes = [1, 256], strides = [1, 1]} : vector<9x256xf32> to vector<1x256xf32>
    %53 = vector.broadcast %52 : vector<1x256xf32> to vector<8x256xf32>
    %54 = arith.mulf %51, %53 : vector<8x256xf32>
    %55 = vector.extract_strided_slice %11 {offsets = [0, 5], sizes = [8, 1], strides = [1, 1]} : vector<8x9xf32> to vector<8x1xf32>
    %56 = vector.broadcast %55 : vector<8x1xf32> to vector<8x256xf32>
    %57 = arith.mulf %54, %56 : vector<8x256xf32>
    %58 = arith.addf %50, %57 : vector<8x256xf32>
    %c241_i32 = arith.constant 241 : i32
    %59 = tpu.dynamic_rotate %10 by %c241_i32 dim 1 : vector<8x256xf32>, i32 -> vector<8x256xf32>
    %60 = vector.extract_strided_slice %12 {offsets = [6, 0], sizes = [1, 256], strides = [1, 1]} : vector<9x256xf32> to vector<1x256xf32>
    %61 = vector.broadcast %60 : vector<1x256xf32> to vector<8x256xf32>
    %62 = arith.mulf %59, %61 : vector<8x256xf32>
    %63 = vector.extract_strided_slice %11 {offsets = [0, 6], sizes = [8, 1], strides = [1, 1]} : vector<8x9xf32> to vector<8x1xf32>
    %64 = vector.broadcast %63 : vector<8x1xf32> to vector<8x256xf32>
    %65 = arith.mulf %62, %64 : vector<8x256xf32>
    %66 = arith.addf %58, %65 : vector<8x256xf32>
    %c240_i32 = arith.constant 240 : i32
    %67 = tpu.dynamic_rotate %10 by %c240_i32 dim 1 : vector<8x256xf32>, i32 -> vector<8x256xf32>
    %68 = vector.extract_strided_slice %12 {offsets = [7, 0], sizes = [1, 256], strides = [1, 1]} : vector<9x256xf32> to vector<1x256xf32>
    %69 = vector.broadcast %68 : vector<1x256xf32> to vector<8x256xf32>
    %70 = arith.mulf %67, %69 : vector<8x256xf32>
    %71 = vector.extract_strided_slice %11 {offsets = [0, 7], sizes = [8, 1], strides = [1, 1]} : vector<8x9xf32> to vector<8x1xf32>
    %72 = vector.broadcast %71 : vector<8x1xf32> to vector<8x256xf32>
    %73 = arith.mulf %70, %72 : vector<8x256xf32>
    %74 = arith.addf %66, %73 : vector<8x256xf32>
    %c239_i32 = arith.constant 239 : i32
    %75 = tpu.dynamic_rotate %10 by %c239_i32 dim 1 : vector<8x256xf32>, i32 -> vector<8x256xf32>
    %76 = vector.extract_strided_slice %12 {offsets = [8, 0], sizes = [1, 256], strides = [1, 1]} : vector<9x256xf32> to vector<1x256xf32>
    %77 = vector.broadcast %76 : vector<1x256xf32> to vector<8x256xf32>
    %78 = arith.mulf %75, %77 : vector<8x256xf32>
    %79 = vector.extract_strided_slice %11 {offsets = [0, 8], sizes = [8, 1], strides = [1, 1]} : vector<8x9xf32> to vector<8x1xf32>
    %80 = vector.broadcast %79 : vector<8x1xf32> to vector<8x256xf32>
    %81 = arith.mulf %78, %80 : vector<8x256xf32>
    %82 = arith.addf %74, %81 : vector<8x256xf32>
    %cst_14 = arith.constant 0.000000e+00 : f32
    %cst_15 = arith.constant 6.000000e+00 : f32
    %83 = vector.broadcast %cst_14 : f32 to vector<8x256xf32>
    %84 = arith.maximumf %83, %82 : vector<8x256xf32>
    %85 = vector.broadcast %cst_15 : f32 to vector<8x256xf32>
    %86 = arith.minimumf %85, %84 : vector<8x256xf32>
    %c0_16 = arith.constant 0 : index
    %c0_17 = arith.constant 0 : index
    %c0_18 = arith.constant 0 : index
    %87 = vector.load %arg7[%c0_16, %c0_17, %c0_18] : memref<1x4x8xf32, #tpu.memory_space<vmem>>, vector<1x4x8xf32>
    %88 = vector.shape_cast %87 : vector<1x4x8xf32> to vector<4x8xf32>
    %cst_19 = arith.constant dense<0.000000e+00> : vector<4x256xf32>
    %89 = tpu.matmul %88, %86, %cst_19 {dimension_numbers = #tpu.dot_dimension_numbers<[1], [0], [0], [1], [0, 0, 1, 1], [], []>} : vector<4x8xf32>, vector<8x256xf32>, vector<4x256xf32> -> vector<4x256xf32>
    %c0_i32 = arith.constant 0 : i32
    %90 = arith.cmpi eq, %arg1, %c0_i32 : i32
    %91 = arith.extui %90 : i1 to i32
    %c0_i32_20 = arith.constant 0 : i32
    %92 = arith.cmpi ne, %91, %c0_i32_20 : i32
    scf.if %92 {
      %c0_25 = arith.constant 0 : index
      %c0_26 = arith.constant 0 : index
      %99 = vector.load %arg11[%c0_25, %c0_26] : memref<4x256xf32, #tpu.memory_space<vmem>>, vector<4x256xf32>
      tpu.vector_store %arg11[%c0_25, %c0_26], %89 {strides = array<i32>} : memref<4x256xf32, #tpu.memory_space<vmem>>, vector<4x256xf32>,
    } else {
    }
    %c0_i32_21 = arith.constant 0 : i32
    %93 = arith.cmpi sgt, %arg1, %c0_i32_21 : i32
    %94 = arith.extui %93 : i1 to i32
    %c0_i32_22 = arith.constant 0 : i32
    %95 = arith.cmpi ne, %94, %c0_i32_22 : i32
    scf.if %95 {
      %c0_25 = arith.constant 0 : index
      %c0_26 = arith.constant 0 : index
      %99 = vector.load %arg11[%c0_25, %c0_26] : memref<4x256xf32, #tpu.memory_space<vmem>>, vector<4x256xf32>
      %100 = arith.addf %99, %89 : vector<4x256xf32>
      %c0_27 = arith.constant 0 : index
      %c0_28 = arith.constant 0 : index
      %101 = vector.load %arg11[%c0_27, %c0_28] : memref<4x256xf32, #tpu.memory_space<vmem>>, vector<4x256xf32>
      tpu.vector_store %arg11[%c0_27, %c0_28], %100 {strides = array<i32>} : memref<4x256xf32, #tpu.memory_space<vmem>>, vector<4x256xf32>,
    } else {
    }
    %c1_i32_23 = arith.constant 1 : i32
    %96 = arith.cmpi eq, %arg1, %c1_i32_23 : i32
    %97 = arith.extui %96 : i1 to i32
    %c0_i32_24 = arith.constant 0 : i32
    %98 = arith.cmpi ne, %97, %c0_i32_24 : i32
    scf.if %98 {
      %c0_25 = arith.constant 0 : index
      %c0_26 = arith.constant 0 : index
      %99 = vector.load %arg11[%c0_25, %c0_26] : memref<4x256xf32, #tpu.memory_space<vmem>>, vector<4x256xf32>
      %c0_27 = arith.constant 0 : index
      %c0_28 = arith.constant 0 : index
      %100 = vector.load %arg8[%c0_27, %c0_28] : memref<4x1xf32, #tpu.memory_space<vmem>>, vector<4x1xf32>
      %101 = vector.broadcast %100 : vector<4x1xf32> to vector<4x256xf32>
      %102 = arith.addf %99, %101 : vector<4x256xf32>
      %103 = arith.addf %102, %1 : vector<4x256xf32>
      %c0_29 = arith.constant 0 : index
      %c0_30 = arith.constant 0 : index
      %c0_31 = arith.constant 0 : index
      %104 = vector.load %arg10[%c0_29, %c0_30, %c0_31] : memref<1x4x256xf32, #tpu.memory_space<vmem>>, vector<1x4x256xf32>
      %105 = vector.shape_cast %104 : vector<1x4x256xf32> to vector<4x256xf32>
      %106 = vector.shape_cast %103 : vector<4x256xf32> to vector<1x4x256xf32>
      tpu.vector_store %arg10[%c0_29, %c0_30, %c0_31], %106 {strides = array<i32>} : memref<1x4x256xf32, #tpu.memory_space<vmem>>, vector<1x4x256xf32>,
    } else {
    }
    return
  }
  func.func @transform_0(%arg0: i32, %arg1: i32) -> (i32, i32, i32) {
    %c0_i32 = arith.constant 0 : i32
    %c0_i32_0 = arith.constant 0 : i32
    %c0_i32_1 = arith.constant 0 : i32
    return %arg0, %c0_i32, %c0_i32_0 : i32, i32, i32
  }
  func.func @transform_1(%arg0: i32, %arg1: i32) -> (i32, i32) {
    %c0_i32 = arith.constant 0 : i32
    %c0_i32_0 = arith.constant 0 : i32
    return %arg1, %c0_i32 : i32, i32
  }
  func.func @transform_2(%arg0: i32, %arg1: i32) -> (i32, i32) {
    %c0_i32 = arith.constant 0 : i32
    %c0_i32_0 = arith.constant 0 : i32
    return %arg1, %c0_i32 : i32, i32
  }
  func.func @transform_3(%arg0: i32, %arg1: i32) -> (i32, i32) {
    %c0_i32 = arith.constant 0 : i32
    %c0_i32_0 = arith.constant 0 : i32
    return %arg1, %c0_i32 : i32, i32
  }
  func.func @transform_4(%arg0: i32, %arg1: i32) -> (i32, i32) {
    %c0_i32 = arith.constant 0 : i32
    %c0_i32_0 = arith.constant 0 : i32
    return %arg1, %c0_i32 : i32, i32
  }
  func.func @transform_5(%arg0: i32, %arg1: i32) -> (i32, i32, i32) {
    %c0_i32 = arith.constant 0 : i32
    %c0_i32_0 = arith.constant 0 : i32
    %c0_i32_1 = arith.constant 0 : i32
    return %arg1, %c0_i32, %c0_i32_0 : i32, i32, i32
  }
  func.func @transform_6(%arg0: i32, %arg1: i32) -> (i32, i32) {
    %c0_i32 = arith.constant 0 : i32
    %c0_i32_0 = arith.constant 0 : i32
    %c0_i32_1 = arith.constant 0 : i32
    return %c0_i32, %c0_i32_0 : i32, i32
  }
  func.func @transform_7(%arg0: i32, %arg1: i32) -> (i32, i32) {
    %c0_i32 = arith.constant 0 : i32
    %c0_i32_0 = arith.constant 0 : i32
    %c0_i32_1 = arith.constant 0 : i32
    return %c0_i32, %c0_i32_0 : i32, i32
  }
  func.func @transform_8(%arg0: i32, %arg1: i32) -> (i32, i32, i32) {
    %c0_i32 = arith.constant 0 : i32
    %c0_i32_0 = arith.constant 0 : i32
    %c0_i32_1 = arith.constant 0 : i32
    return %arg0, %c0_i32, %c0_i32_0 : i32, i32, i32
  }
}

</mosaic_0001>

<llo_original>
// kernel: tpu_custom_call.1
$region0: #{tpu_custom_call.1}
  #allocation0 [shape = 'u32[]', space=smem, size = 0x4, offset = 0x4, fixed_abs, tag = 'smem constant byte address 0x4 - core index']
  #allocation1 [shape = 'u32[144,128]{1,0:T(1,128)}', space=vmem, size = 0x12000, scoped, tag = 'internal scratch']
  #allocation2 [shape = 'f32[4,256]{1,0:T(4,128)}', space=vmem, size = 0x1000, scoped, tag = 'scratch operand']
  %s0 = inlined_call_operand.vmem [shape: f32[2,4,256], index: 0, kind: input, shape index: {}]
  %s1 = inlined_call_operand.vmem [shape: f32[16,4], index: 1, kind: input, shape index: {}]
  %s2 = inlined_call_operand.vmem [shape: f32[16,1], index: 2, kind: input, shape index: {}]
  %s3 = inlined_call_operand.vmem [shape: f32[16,9], index: 3, kind: input, shape index: {}]
  %s4 = inlined_call_operand.vmem [shape: f32[16,1], index: 4, kind: input, shape index: {}]
  %s5 = inlined_call_operand.vmem [shape: f32[2,4,8], index: 5, kind: input, shape index: {}]
  %s6 = inlined_call_operand.vmem [shape: f32[4,1], index: 6, kind: input, shape index: {}]
  %s7 = inlined_call_operand.vmem [shape: f32[9,256], index: 7, kind: input, shape index: {}]
  %s8 = inlined_call_operand.hbm [shape: f32[2,4,256], index: 8, kind: output, shape index: {}]
  %s9 = sld [smem:[#allocation0]]
  $region77: #{tpu_custom_call.1} parent=0
    _
  %s11 = ssub.s32 1, %s9
  %s12 = scalar_select 0, %s11, %s9
  $region1: #{tpu_custom_call.1} parent=0
    #allocation3 [shape = 'u8[8192]{0}', space=vmem, size = 0x2000, scoped, tag = 'output window, operand 0']
    #allocation4 [shape = 's32[2]{0}', space=sflag, size = 0x8, scoped, tag = 'scoped memory for tpu_custom_call.1']
    %13 = vsyncpa [#allocation4], 0
    %s14 = scalar_lea.sflag [#allocation4], 1
    %15 = vsyncpa %s14, 0
    loop: start=0, step=1, limit=6
    $region2: #{tpu_custom_call.1} parent=1 // loop_pre_header
      _
    $region3: #{tpu_custom_call.1} parent=1 // loop_header
      %s17 = sphi 0, %s21
      %p18 = scmp.ge.s32.totalorder %s17, 6
      %s24 = sphi 0, %s36
      %s25 = sphi 0, %s32
      %s26 = sphi 0, %s24
      %s27 = sphi 0, %s25
      %s28 = sphi 0, %s26
      %s29 = sphi 0, %s27
      %s39 = sphi 0, %s41
      %s42 = sphi 0, %s39
      %s43 = sphi 0, %s42
      %s59 = sphi 0, %s43
      %s65 = sphi 0, %s67
      %s68 = sphi 0, %s65
      %s69 = sphi 0, %s68
      %s85 = sphi 0, %s69
      %s91 = sphi 0, %s93
      %s94 = sphi 0, %s91
      %s95 = sphi 0, %s94
      %s111 = sphi 0, %s95
      %s117 = sphi 0, %s119
      %s120 = sphi 0, %s117
      %s121 = sphi 0, %s120
      %s137 = sphi 0, %s121
      %s143 = sphi 0, %s145
      %s146 = sphi 0, %s143
      %s147 = sphi 0, %s146
      %s163 = sphi 0, %s147
      %s169 = sphi 0, %s171
      %s172 = sphi 0, %s169
      %s173 = sphi 0, %s172
      %s189 = sphi 0, %s173
      %s193 = sphi 0, %s193
      %s195 = sphi 0, %s193
      %s196 = sphi 0, %s195
      %s210 = sphi 0, %s196
      %s214 = sphi 0, %s214
      %s216 = sphi 0, %s214
      %s217 = sphi 0, %s216
      %s231 = sphi 0, %s217
      %s237 = sphi 0, %s239
      %s240 = sphi 0, %s237
      %s241 = sphi 0, %s240
      %s257 = sphi 0, %s241
    $region4: #{tpu_custom_call.1} parent=1 // loop_header_branch
      %20 = sbr.rel (%p18) target = $region8
    $region5: #{tpu_custom_call.1} parent=1 // loop_body
      %s22 = ssub.s32 %s17, 1
      %s23 = ssub.s32 %s17, 2
      %s30 = sadd.s32 1, %s25
      %p31 = scmp.ge.s32.totalorder %s30, 2
      %s32 = scalar_select %p31, 0, %s30
      %s33 = sadd.s32 1, %s24
      %s34 = scalar_select %p31, %s33, %s24
      %p35 = scmp.ge.s32.totalorder %s34, 2
      %s36 = scalar_select %p35, 0, %s34
      %s37 = ssub.s32 %s24, %s36
      %p38 = scmp.eq.s32.totalorder %s37, 0
      %s40 = sadd.s32 %s39, 1
      %s41 = scalar_select %p38, %s39, %s40
      %p44 = pneg %p38
      %p45 = scmp.eq.s32.totalorder %s17, 3
      %p46 = por %p44, %p45
      %p47 = scmp.ne.s32.totalorder %s39, %s42
      %p48 = scmp.eq.s32.totalorder %s17, 0
      %p49 = por %p47, %p48
      %p50 = scmp.ne.s32.totalorder %s39, %s42
      %p51 = scmp.eq.s32.totalorder %s22, 3
      %p52 = por %p50, %p51
      %p53 = scmp.ne.s32.totalorder %s42, %s43
      %p54 = scmp.eq.s32.totalorder %s22, 0
      %p55 = por %p53, %p54
      %p56 = scmp.ne.s32.totalorder %s42, %s43
      %p57 = scmp.eq.s32.totalorder %s23, 3
      %p58 = por %p56, %p57
      %p60 = scmp.ne.s32.totalorder %s43, %s59
      %p61 = scmp.eq.s32.totalorder %s23, 0
      %p62 = por %p60, %p61
      %s63 = ssub.s32 %s25, %s32
      %p64 = scmp.eq.s32.totalorder %s63, 0
      %s66 = sadd.s32 %s65, 1
      %s67 = scalar_select %p64, %s65, %s66
      %p70 = pneg %p64
      %p71 = scmp.eq.s32.totalorder %s17, 3
      %p72 = por %p70, %p71
      %p73 = scmp.ne.s32.totalorder %s65, %s68
      %p74 = scmp.eq.s32.totalorder %s17, 0
      %p75 = por %p73, %p74
      %p76 = scmp.ne.s32.totalorder %s65, %s68
      %p77 = scmp.eq.s32.totalorder %s22, 3
      %p78 = por %p76, %p77
      %p79 = scmp.ne.s32.totalorder %s68, %s69
      %p80 = scmp.eq.s32.totalorder %s22, 0
      %p81 = por %p79, %p80
      %p82 = scmp.ne.s32.totalorder %s68, %s69
      %p83 = scmp.eq.s32.totalorder %s23, 3
      %p84 = por %p82, %p83
      %p86 = scmp.ne.s32.totalorder %s69, %s85
      %p87 = scmp.eq.s32.totalorder %s23, 0
      %p88 = por %p86, %p87
      %s89 = ssub.s32 %s25, %s32
      %p90 = scmp.eq.s32.totalorder %s89, 0
      %s92 = sadd.s32 %s91, 1
      %s93 = scalar_select %p90, %s91, %s92
      %p96 = pneg %p90
      %p97 = scmp.eq.s32.totalorder %s17, 3
      %p98 = por %p96, %p97
      %p99 = scmp.ne.s32.totalorder %s91, %s94
      %p100 = scmp.eq.s32.totalorder %s17, 0
      %p101 = por %p99, %p100
      %p102 = scmp.ne.s32.totalorder %s91, %s94
      %p103 = scmp.eq.s32.totalorder %s22, 3
      %p104 = por %p102, %p103
      %p105 = scmp.ne.s32.totalorder %s94, %s95
      %p106 = scmp.eq.s32.totalorder %s22, 0
      %p107 = por %p105, %p106
      %p108 = scmp.ne.s32.totalorder %s94, %s95
      %p109 = scmp.eq.s32.totalorder %s23, 3
      %p110 = por %p108, %p109
      %p112 = scmp.ne.s32.totalorder %s95, %s111
      %p113 = scmp.eq.s32.totalorder %s23, 0
      %p114 = por %p112, %p113
      %s115 = ssub.s32 %s25, %s32
      %p116 = scmp.eq.s32.totalorder %s115, 0
      %s118 = sadd.s32 %s117, 1
      %s119 = scalar_select %p116, %s117, %s118
      %p122 = pneg %p116
      %p123 = scmp.eq.s32.totalorder %s17, 3
      %p124 = por %p122, %p123
      %p125 = scmp.ne.s32.totalorder %s117, %s120
      %p126 = scmp.eq.s32.totalorder %s17, 0
      %p127 = por %p125, %p126
      %p128 = scmp.ne.s32.totalorder %s117, %s120
      %p129 = scmp.eq.s32.totalorder %s22, 3
      %p130 = por %p128, %p129
      %p131 = scmp.ne.s32.totalorder %s120, %s121
      %p132 = scmp.eq.s32.totalorder %s22, 0
      %p133 = por %p131, %p132
      %p134 = scmp.ne.s32.totalorder %s120, %s121
      %p135 = scmp.eq.s32.totalorder %s23, 3
      %p136 = por %p134, %p135
      %p138 = scmp.ne.s32.totalorder %s121, %s137
      %p139 = scmp.eq.s32.totalorder %s23, 0
      %p140 = por %p138, %p139
      %s141 = ssub.s32 %s25, %s32
      %p142 = scmp.eq.s32.totalorder %s141, 0
      %s144 = sadd.s32 %s143, 1
      %s145 = scalar_select %p142, %s143, %s144
      %p148 = pneg %p142
      %p149 = scmp.eq.s32.totalorder %s17, 3
      %p150 = por %p148, %p149
      %p151 = scmp.ne.s32.totalorder %s143, %s146
      %p152 = scmp.eq.s32.totalorder %s17, 0
      %p153 = por %p151, %p152
      %p154 = scmp.ne.s32.totalorder %s143, %s146
      %p155 = scmp.eq.s32.totalorder %s22, 3
      %p156 = por %p154, %p155
      %p157 = scmp.ne.s32.totalorder %s146, %s147
      %p158 = scmp.eq.s32.totalorder %s22, 0
      %p159 = por %p157, %p158
      %p160 = scmp.ne.s32.totalorder %s146, %s147
      %p161 = scmp.eq.s32.totalorder %s23, 3
      %p162 = por %p160, %p161
      %p164 = scmp.ne.s32.totalorder %s147, %s163
      %p165 = scmp.eq.s32.totalorder %s23, 0
      %p166 = por %p164, %p165
      %s167 = ssub.s32 %s25, %s32
      %p168 = scmp.eq.s32.totalorder %s167, 0
      %s170 = sadd.s32 %s169, 1
      %s171 = scalar_select %p168, %s169, %s170
      %p174 = pneg %p168
      %p175 = scmp.eq.s32.totalorder %s17, 3
      %p176 = por %p174, %p175
      %p177 = scmp.ne.s32.totalorder %s169, %s172
      %p178 = scmp.eq.s32.totalorder %s17, 0
      %p179 = por %p177, %p178
      %p180 = scmp.ne.s32.totalorder %s169, %s172
      %p181 = scmp.eq.s32.totalorder %s22, 3
      %p182 = por %p180, %p181
      %p183 = scmp.ne.s32.totalorder %s172, %s173
      %p184 = scmp.eq.s32.totalorder %s22, 0
      %p185 = por %p183, %p184
      %p186 = scmp.ne.s32.totalorder %s172, %s173
      %p187 = scmp.eq.s32.totalorder %s23, 3
      %p188 = por %p186, %p187
      %p190 = scmp.ne.s32.totalorder %s173, %s189
      %p191 = scmp.eq.s32.totalorder %s23, 0
      %p192 = por %p190, %p191
      %s194 = sadd.s32 %s193, 1
      %p197 = scmp.eq.s32.totalorder %s17, 3
      %p198 = scmp.ne.s32.totalorder %s193, %s195
      %p199 = scmp.eq.s32.totalorder %s17, 0
      %p200 = por %p198, %p199
      %p201 = scmp.ne.s32.totalorder %s193, %s195
      %p202 = scmp.eq.s32.totalorder %s22, 3
      %p203 = por %p201, %p202
      %p204 = scmp.ne.s32.totalorder %s195, %s196
      %p205 = scmp.eq.s32.totalorder %s22, 0
      %p206 = por %p204, %p205
      %p207 = scmp.ne.s32.totalorder %s195, %s196
      %p208 = scmp.eq.s32.totalorder %s23, 3
      %p209 = por %p207, %p208
      %p211 = scmp.ne.s32.totalorder %s196, %s210
      %p212 = scmp.eq.s32.totalorder %s23, 0
      %p213 = por %p211, %p212
      %s215 = sadd.s32 %s214, 1
      %p218 = scmp.eq.s32.totalorder %s17, 3
      %p219 = scmp.ne.s32.totalorder %s214, %s216
      %p220 = scmp.eq.s32.totalorder %s17, 0
      %p221 = por %p219, %p220
      %p222 = scmp.ne.s32.totalorder %s214, %s216
      %p223 = scmp.eq.s32.totalorder %s22, 3
      %p224 = por %p222, %p223
      %p225 = scmp.ne.s32.totalorder %s216, %s217
      %p226 = scmp.eq.s32.totalorder %s22, 0
      %p227 = por %p225, %p226
      %p228 = scmp.ne.s32.totalorder %s216, %s217
      %p229 = scmp.eq.s32.totalorder %s23, 3
      %p230 = por %p228, %p229
      %p232 = scmp.ne.s32.totalorder %s217, %s231
      %p233 = scmp.eq.s32.totalorder %s23, 0
      %p234 = por %p232, %p233
      %s235 = ssub.s32 %s24, %s36
      %p236 = scmp.eq.s32.totalorder %s235, 0
      %s238 = sadd.s32 %s237, 1
      %s239 = scalar_select %p236, %s237, %s238
      %p242 = pneg %p236
      %p243 = scmp.eq.s32.totalorder %s17, 3
      %p244 = por %p242, %p243
      %p245 = scmp.ne.s32.totalorder %s237, %s240
      %p246 = scmp.eq.s32.totalorder %s17, 0
      %p247 = por %p245, %p246
      %p248 = scmp.ne.s32.totalorder %s237, %s240
      %p249 = scmp.eq.s32.totalorder %s22, 3
      %p250 = por %p248, %p249
      %p251 = scmp.ne.s32.totalorder %s240, %s241
      %p252 = scmp.eq.s32.totalorder %s22, 0
      %p253 = por %p251, %p252
      %p254 = scmp.ne.s32.totalorder %s240, %s241
      %p255 = scmp.eq.s32.totalorder %s23, 3
      %p256 = por %p254, %p255
      %p258 = scmp.ne.s32.totalorder %s241, %s257
      %p259 = scmp.eq.s32.totalorder %s23, 0
      %p260 = por %p258, %p259
      %p261 = scmp.le.s32.totalorder 1, %s17
      %p262 = scmp.lt.s32.totalorder %s17, 5
      %p263 = pnand %p261, %p262
      %p264 = pneg %p263
      // Predicated region
      $region9: #{tpu_custom_call.1} parent=5 // pred_check
        _
      $region10: #{tpu_custom_call.1} parent=5 // pred_check_branch
        %266 = sbr.rel (%p263) target = $region12
      $region11: #{tpu_custom_call.1} parent=5 // pred_region
        %s267 = ssub.s32 %s17, 1
        // Predicated region
        $region13: #{tpu_custom_call.1} parent=11 // pred_check
          %p268 = pneg %p206
        $region14: #{tpu_custom_call.1} parent=11 // pred_check_branch
          %270 = sbr.rel (%p268) target = $region16
        $region15: #{tpu_custom_call.1} parent=11 // pred_region
          _
        $region16: #{tpu_custom_call.1} parent=11 // pred_fallthru
          _
        // Predicated region
        $region17: #{tpu_custom_call.1} parent=11 // pred_check
          %p271 = pneg %p227
        $region18: #{tpu_custom_call.1} parent=11 // pred_check_branch
          %273 = sbr.rel (%p271) target = $region20
        $region19: #{tpu_custom_call.1} parent=11 // pred_region
          _
        $region20: #{tpu_custom_call.1} parent=11 // pred_fallthru
          _
      $region12: #{tpu_custom_call.1} parent=5 // pred_fallthru
        _
      %p274 = scmp.lt.s32.totalorder %s17, 4
      // Predicated region
      $region21: #{tpu_custom_call.1} parent=5 // pred_check
        %p275 = pneg %p274
      $region22: #{tpu_custom_call.1} parent=5 // pred_check_branch
        %277 = sbr.rel (%p275) target = $region24
      $region23: #{tpu_custom_call.1} parent=5 // pred_region
        // Predicated region
        $region25: #{tpu_custom_call.1} parent=23 // pred_check
          %p278 = pneg %p49
        $region26: #{tpu_custom_call.1} parent=23 // pred_check_branch
          %280 = sbr.rel (%p278) target = $region28
        $region27: #{tpu_custom_call.1} parent=23 // pred_region
          %p281 = scmp.lt.s32.totalorder %s24, 1
          %s282 = scalar_select %p281, %s24, 1
          %s283 = smul.addr %s282, 2
          %s284 = smul.addr %s283, 4
          %s285 = scalar_lea.vmem %s0, %s284
        $region28: #{tpu_custom_call.1} parent=23 // pred_fallthru
          _
        // Predicated region
        $region29: #{tpu_custom_call.1} parent=23 // pred_check
          %p286 = pneg %p75
        $region30: #{tpu_custom_call.1} parent=23 // pred_check_branch
          %288 = sbr.rel (%p286) target = $region32
        $region31: #{tpu_custom_call.1} parent=23 // pred_region
          %p289 = scmp.lt.s32.totalorder %s25, 1
          %s290 = scalar_select %p289, %s25, 1
          %s291 = smul.addr %s290, 8
          %s292 = scalar_lea.vmem %s1, %s291
        $region32: #{tpu_custom_call.1} parent=23 // pred_fallthru
          _
        // Predicated region
        $region33: #{tpu_custom_call.1} parent=23 // pred_check
          %p293 = pneg %p101
        $region34: #{tpu_custom_call.1} parent=23 // pred_check_branch
          %295 = sbr.rel (%p293) target = $region36
        $region35: #{tpu_custom_call.1} parent=23 // pred_region
          %p296 = scmp.lt.s32.totalorder %s25, 1
          %s297 = scalar_select %p296, %s25, 1
          %s298 = smul.addr %s297, 8
          %s299 = scalar_lea.vmem %s2, %s298
        $region36: #{tpu_custom_call.1} parent=23 // pred_fallthru
          _
        // Predicated region
        $region37: #{tpu_custom_call.1} parent=23 // pred_check
          %p300 = pneg %p127
        $region38: #{tpu_custom_call.1} parent=23 // pred_check_branch
          %302 = sbr.rel (%p300) target = $region40
        $region39: #{tpu_custom_call.1} parent=23 // pred_region
          %p303 = scmp.lt.s32.totalorder %s25, 1
          %s304 = scalar_select %p303, %s25, 1
          %s305 = smul.addr %s304, 8
          %s306 = scalar_lea.vmem %s3, %s305
        $region40: #{tpu_custom_call.1} parent=23 // pred_fallthru
          _
        // Predicated region
        $region41: #{tpu_custom_call.1} parent=23 // pred_check
          %p307 = pneg %p153
        $region42: #{tpu_custom_call.1} parent=23 // pred_check_branch
          %309 = sbr.rel (%p307) target = $region44
        $region43: #{tpu_custom_call.1} parent=23 // pred_region
          %p310 = scmp.lt.s32.totalorder %s25, 1
          %s311 = scalar_select %p310, %s25, 1
          %s312 = smul.addr %s311, 8
          %s313 = scalar_lea.vmem %s4, %s312
        $region44: #{tpu_custom_call.1} parent=23 // pred_fallthru
          _
        // Predicated region
        $region45: #{tpu_custom_call.1} parent=23 // pred_check
          %p314 = pneg %p179
        $region46: #{tpu_custom_call.1} parent=23 // pred_check_branch
          %316 = sbr.rel (%p314) target = $region48
        $region47: #{tpu_custom_call.1} parent=23 // pred_region
          %p317 = scmp.lt.s32.totalorder %s25, 1
          %s318 = scalar_select %p317, %s25, 1
          %s319 = smul.addr %s318, 4
          %s320 = scalar_lea.vmem %s5, %s319
        $region48: #{tpu_custom_call.1} parent=23 // pred_fallthru
          _
      $region24: #{tpu_custom_call.1} parent=5 // pred_fallthru
        _
      %p321 = scmp.le.s32.totalorder 1, %s17
      %p322 = scmp.lt.s32.totalorder %s17, 5
      %p323 = pnand %p321, %p322
      %p324 = pneg %p323
      // Predicated region
      $region49: #{tpu_custom_call.1} parent=5 // pred_check
        _
      $region50: #{tpu_custom_call.1} parent=5 // pred_check_branch
        %326 = sbr.rel (%p323) target = $region52
      $region51: #{tpu_custom_call.1} parent=5 // pred_region
        %s327 = ssub.s32 %s17, 1
        %p328 = scmp.lt.s32.totalorder %s26, 1
        %s329 = scalar_select %p328, %s26, 1
        %s330 = smul.addr %s329, 2
        %s331 = smul.addr %s330, 4
        %s332 = scalar_lea.vmem %s0, %s331
        %p333 = pneg %p55
        %p334 = pneg %p52
        %p335 = scmp.lt.s32.totalorder %s27, 1
        %s336 = scalar_select %p335, %s27, 1
        %s337 = smul.addr %s336, 8
        %s338 = scalar_lea.vmem %s1, %s337
        %p339 = pneg %p81
        %p340 = pneg %p78
        %p341 = scmp.lt.s32.totalorder %s27, 1
        %s342 = scalar_select %p341, %s27, 1
        %s343 = smul.addr %s342, 8
        %s344 = scalar_lea.vmem %s2, %s343
        %p345 = pneg %p107
        %p346 = pneg %p104
        %p347 = scmp.lt.s32.totalorder %s27, 1
        %s348 = scalar_select %p347, %s27, 1
        %s349 = smul.addr %s348, 8
        %s350 = scalar_lea.vmem %s3, %s349
        %p351 = pneg %p133
        %p352 = pneg %p130
        %p353 = scmp.lt.s32.totalorder %s27, 1
        %s354 = scalar_select %p353, %s27, 1
        %s355 = smul.addr %s354, 8
        %s356 = scalar_lea.vmem %s4, %s355
        %p357 = pneg %p159
        %p358 = pneg %p156
        %p359 = scmp.lt.s32.totalorder %s27, 1
        %s360 = scalar_select %p359, %s27, 1
        %s361 = smul.addr %s360, 4
        %s362 = scalar_lea.vmem %s5, %s361
        %p363 = pneg %p185
        %p364 = pneg %p182
        %p365 = pneg %p206
        %p366 = pneg %p203
        %p367 = pneg %p227
        %p368 = pneg %p224
        %p369 = pneg %p253
        %p370 = pneg %p250
        %s371 = sand.u32 %s240, 1
        %s372 = scalar_lea.sflag [#allocation4], %s371
        %s373 = sand.u32 %s240, 1
        %s374 = smul.addr %s373, 8
        %s375 = scalar_lea.vmem [#allocation3], %s374
        %p376 = scmp.lt.s32.totalorder %s26, 1
        %s377 = scalar_select %p376, %s26, 1
        %s378 = smul.addr %s377, 2
        %s379 = smul.addr %s378, 4
        %s380 = scalar_lea.vmem %s0, %s379
        %p381 = scmp.lt.s32.totalorder %s27, 1
        %s382 = scalar_select %p381, %s27, 1
        %s383 = smul.addr %s382, 8
        %s384 = scalar_lea.vmem %s1, %s383
        %p385 = scmp.lt.s32.totalorder %s27, 1
        %s386 = scalar_select %p385, %s27, 1
        %s387 = smul.addr %s386, 8
        %s388 = scalar_lea.vmem %s2, %s387
        %p389 = scmp.lt.s32.totalorder %s27, 1
        %s390 = scalar_select %p389, %s27, 1
        %s391 = smul.addr %s390, 8
        %s392 = scalar_lea.vmem %s3, %s391
        %p393 = scmp.lt.s32.totalorder %s27, 1
        %s394 = scalar_select %p393, %s27, 1
        %s395 = smul.addr %s394, 8
        %s396 = scalar_lea.vmem %s4, %s395
        %p397 = scmp.lt.s32.totalorder %s27, 1
        %s398 = scalar_select %p397, %s27, 1
        %s399 = smul.addr %s398, 4
        %s400 = scalar_lea.vmem %s5, %s399
        %v401 = vld [vmem:[%s380] sm:$0xff]
        %v402 = vld [vmem:[%s384] sm:$0xff]
        %v403 = vld [vmem:[%s388] sm:$0xff]
        %405 = vset.pattern.permute.xlu0 0
        %406 = vperm.xlu0 %405, %v403
        %v407 = vpop.permute.xlu0 %406
        %v410 = vcombine.high %v401, %v401
        %vm411 = vcmask 31744
        %v413 = vsel %vm411, %v402, 0
        %vm415 = vcmask 1043456
        %v416 = vsel %vm415, %v401, 0
        %v418 = vsel %vm415, %v410, 0
        %420 = vmatprep.subr.mxu0 %v418
        %421 = vmatpush1.msra.mxu0 %v416
        %422 = vmatprep.subr.mxu0 0.0
        %423 = vmatpush1.msra.mxu0 0.0
        %424 = vmatprep.subr.mxu0 0.0
        %425 = vmatpush1.msra.mxu0 0.0
        %426 = vmatprep.subr.mxu0 0.0
        %427 = vmatpush1.msra.mxu0 0.0
        %428 = vmatprep.subr.mxu0 0.0
        %429 = vmatpush1.msra.mxu0 0.0
        %430 = vmatprep.subr.mxu0 0.0
        %431 = vmatpush1.msra.mxu0 0.0
        %432 = vmatprep.subr.mxu0 0.0
        %433 = vmatpush1.msra.mxu0 0.0
        %434 = vmatprep.subr.mxu0 0.0
        %435 = vmatpush1.msra.mxu0 0.0
        %436 = vmatprep.subr.mxu0 0.0
        %437 = vmatpush1.msra.mxu0 0.0
        %438 = vmatprep.subr.mxu0 0.0
        %439 = vmatpush1.msra.mxu0 0.0
        %440 = vmatprep.subr.mxu0 0.0
        %441 = vmatpush1.msra.mxu0 0.0
        %442 = vmatprep.subr.mxu0 0.0
        %443 = vmatpush1.msra.mxu0 0.0
        %444 = vmatprep.subr.mxu0 0.0
        %445 = vmatpush1.msra.mxu0 0.0
        %446 = vmatprep.subr.mxu0 0.0
        %447 = vmatpush1.msra.mxu0 0.0
        %448 = vmatprep.subr.mxu0 0.0
        %449 = vmatpush1.msra.mxu0 0.0
        %450 = vmatprep.subr.mxu0 0.0
        %451 = vmatpush1.msra.mxu0 0.0
        %452 = vmatprep.subr.mxu0 0.0
        %453 = vmatpush1.msra.mxu0 0.0
        %454 = vmatprep.subr.mxu0 0.0
        %455 = vmatpush1.msra.mxu0 0.0
        %456 = vmatprep.subr.mxu0 0.0
        %457 = vmatpush1.msra.mxu0 0.0
        %458 = vmatprep.subr.mxu0 0.0
        %459 = vmatpush1.msra.mxu0 0.0
        %460 = vmatprep.subr.mxu0 0.0
        %461 = vmatpush1.msra.mxu0 0.0
        %462 = vmatprep.subr.mxu0 0.0
        %463 = vmatpush1.msra.mxu0 0.0
        %464 = vmatprep.subr.mxu0 0.0
        %465 = vmatpush1.msra.mxu0 0.0
        %466 = vmatprep.subr.mxu0 0.0
        %467 = vmatpush1.msra.mxu0 0.0
        %468 = vmatprep.subr.mxu0 0.0
        %469 = vmatpush1.msra.mxu0 0.0
        %470 = vmatprep.subr.mxu0 0.0
        %471 = vmatpush1.msra.mxu0 0.0
        %472 = vmatprep.subr.mxu0 0.0
        %473 = vmatpush1.msra.mxu0 0.0
        %474 = vmatprep.subr.mxu0 0.0
        %475 = vmatpush1.msra.mxu0 0.0
        %476 = vmatprep.subr.mxu0 0.0
        %477 = vmatpush1.msra.mxu0 0.0
        %478 = vmatprep.subr.mxu0 0.0
        %479 = vmatpush1.msra.mxu0 0.0
        %480 = vmatprep.subr.mxu0 0.0
        %481 = vmatpush1.msra.mxu0 0.0
        %482 = vmatprep.subr.mxu0 0.0
        %483 = vmatpush1.msra.mxu0 0.0
        %484 = vmatprep.mubr.f32.mxu0 0.0
        %485 = vmatmul.mubr.f32.gmra.mrb[0].mxu0 %v413
        %v486 = vpop.f32.mrb[0].mxu0
        %v487 = vadd.f32 %v407, %v486
        %v488 = vpop.f32.mrb[0].mxu0
        %v489 = vadd.f32 %v407, %v488
        %490 = vdwg.mxu0
        %v491 = vmax.f32 %v487, 0.0
        %v492 = vmax.f32 %v489, 0.0
        %v493 = vmin.f32 %v491, 6.0
        %v494 = vmin.f32 %v492, 6.0
        %v495 = vld [vmem:[%s392] sm:$0xff]
        %v496 = vld [vmem:[%s7] sm:$0xff]
        %v497 = vld [vmem:[%s7 + $0x8] sm:$0xff]
        %v498 = vld [vmem:[%s7 + $0x10] sm:$0x1]
        %v499 = vld [vmem:[%s7 + $0x18] sm:$0x1]
        %501 = vset.pattern.permute.xlu0 4
        %502 = vperm.xlu0 %501, %v495
        %v503 = vpop.permute.xlu0 %502
        %v505 = vmul.f32 %v493, %v503
        %v506 = vmul.f32 %v494, %v503
        %v507 = vld [vmem:[%s396] sm:$0xff]
        %509 = vset.pattern.permute.xlu0 0
        %510 = vperm.xlu0 %509, %v507
        %v511 = vpop.permute.xlu0 %510
        %v513 = vadd.f32 %v505, %v511
        %v514 = vadd.f32 %v506, %v511
        %515 = vrot.lane.b32.xlu0 %v493, 17
        %v516 = vpop.permute.xlu0 %515
        %517 = vrot.lane.b32.xlu0 %v494, 17
        %v518 = vpop.permute.xlu0 %517
        %v519 = vlaneseq
        %v520 = vand.u32 %v519, 127
        %vm521 = vcmp.lt.s32.totalorder %v520, 17
        %v522 = vsel %vm521, %v516, %v518
        %v523 = vsel %vm521, %v518, %v516
        %v524 = vlaneseq
        %v525 = vshrl.u32 %v524, 7
        %v526 = vsub.s32 0, %v525
        %v527 = vrot.slane %v496, %v526
        %v528 = vlaneseq
        %v529 = vshrl.u32 %v528, 7
        %v530 = vsub.s32 0, %v529
        %v531 = vrot.slane %v497, %v530
        %v532 = vmul.f32 %v523, %v527
        %v533 = vmul.f32 %v522, %v531
        %534 = vset.pattern.permute.xlu0 0
        %535 = vperm.xlu0 %534, %v495
        %v536 = vpop.permute.xlu0 %535
        %v538 = vmul.f32 %v532, %v536
        %v539 = vmul.f32 %v533, %v536
        %v540 = vadd.f32 %v513, %v538
        %v541 = vadd.f32 %v514, %v539
        %542 = vrot.lane.b32.xlu0 %v493, 16
        %v543 = vpop.permute.xlu0 %542
        %544 = vrot.lane.b32.xlu0 %v494, 16
        %v545 = vpop.permute.xlu0 %544
        %vm546 = vcmp.lt.s32.totalorder %v520, 16
        %v547 = vsel %vm546, %v543, %v545
        %v548 = vsel %vm546, %v545, %v543
        %v549 = vlaneseq
        %v550 = vshrl.u32 %v549, 7
        %v551 = vsub.s32 1, %v550
        %v552 = vrot.slane %v496, %v551
        %v553 = vlaneseq
        %v554 = vshrl.u32 %v553, 7
        %v555 = vsub.s32 1, %v554
        %v556 = vrot.slane %v497, %v555
        %v557 = vmul.f32 %v548, %v552
        %v558 = vmul.f32 %v547, %v556
        %559 = vset.pattern.permute.xlu0 1
        %560 = vperm.xlu0 %559, %v495
        %v561 = vpop.permute.xlu0 %560
        %v563 = vmul.f32 %v557, %v561
        %v564 = vmul.f32 %v558, %v561
        %v565 = vadd.f32 %v540, %v563
        %v566 = vadd.f32 %v541, %v564
        %567 = vrot.lane.b32.xlu0 %v493, 15
        %v568 = vpop.permute.xlu0 %567
        %569 = vrot.lane.b32.xlu0 %v494, 15
        %v570 = vpop.permute.xlu0 %569
        %vm571 = vcmp.lt.s32.totalorder %v520, 15
        %v572 = vsel %vm571, %v568, %v570
        %v573 = vsel %vm571, %v570, %v568
        %v574 = vlaneseq
        %v575 = vshrl.u32 %v574, 7
        %v576 = vsub.s32 2, %v575
        %v577 = vrot.slane %v496, %v576
        %v578 = vlaneseq
        %v579 = vshrl.u32 %v578, 7
        %v580 = vsub.s32 2, %v579
        %v581 = vrot.slane %v497, %v580
        %v582 = vmul.f32 %v573, %v577
        %v583 = vmul.f32 %v572, %v581
        %584 = vset.pattern.permute.xlu0 2
        %585 = vperm.xlu0 %584, %v495
        %v586 = vpop.permute.xlu0 %585
        %v588 = vmul.f32 %v582, %v586
        %v589 = vmul.f32 %v583, %v586
        %v590 = vadd.f32 %v565, %v588
        %v591 = vadd.f32 %v566, %v589
        %592 = vrot.lane.b32.xlu0 %v493, 1
        %v593 = vpop.permute.xlu0 %592
        %594 = vrot.lane.b32.xlu0 %v494, 1
        %v595 = vpop.permute.xlu0 %594
        %vm596 = vcmp.lt.s32.totalorder %v520, 1
        %v597 = vsel %vm596, %v593, %v595
        %v598 = vsel %vm596, %v595, %v593
        %v599 = vlaneseq
        %v600 = vshrl.u32 %v599, 7
        %v601 = vsub.s32 3, %v600
        %v602 = vrot.slane %v496, %v601
        %v603 = vlaneseq
        %v604 = vshrl.u32 %v603, 7
        %v605 = vsub.s32 3, %v604
        %v606 = vrot.slane %v497, %v605
        %v607 = vmul.f32 %v598, %v602
        %v608 = vmul.f32 %v597, %v606
        %609 = vset.pattern.permute.xlu0 3
        %610 = vperm.xlu0 %609, %v495
        %v611 = vpop.permute.xlu0 %610
        %v613 = vmul.f32 %v607, %v611
        %v614 = vmul.f32 %v608, %v611
        %v615 = vadd.f32 %v590, %v613
        %v616 = vadd.f32 %v591, %v614
        %617 = vrot.lane.b32.xlu0 %v493, 127
        %v618 = vpop.permute.xlu0 %617
        %619 = vrot.lane.b32.xlu0 %v494, 127
        %v620 = vpop.permute.xlu0 %619
        %vm621 = vcmp.lt.s32.totalorder %v520, 127
        %v622 = vsel %vm621, %v618, %v620
        %v623 = vsel %vm621, %v620, %v618
        %v624 = vlaneseq
        %v625 = vshrl.u32 %v624, 7
        %v626 = vsub.s32 5, %v625
        %v627 = vrot.slane %v496, %v626
        %v628 = vlaneseq
        %v629 = vshrl.u32 %v628, 7
        %v630 = vsub.s32 5, %v629
        %v631 = vrot.slane %v497, %v630
        %v632 = vmul.f32 %v622, %v627
        %v633 = vmul.f32 %v623, %v631
        %634 = vset.pattern.permute.xlu0 5
        %635 = vperm.xlu0 %634, %v495
        %v636 = vpop.permute.xlu0 %635
        %v638 = vmul.f32 %v632, %v636
        %v639 = vmul.f32 %v633, %v636
        %v640 = vadd.f32 %v615, %v638
        %v641 = vadd.f32 %v616, %v639
        %642 = vrot.lane.b32.xlu0 %v493, 113
        %v643 = vpop.permute.xlu0 %642
        %644 = vrot.lane.b32.xlu0 %v494, 113
        %v645 = vpop.permute.xlu0 %644
        %vm646 = vcmp.lt.s32.totalorder %v520, 113
        %v647 = vsel %vm646, %v643, %v645
        %v648 = vsel %vm646, %v645, %v643
        %v649 = vlaneseq
        %v650 = vshrl.u32 %v649, 7
        %v651 = vsub.s32 6, %v650
        %v652 = vrot.slane %v496, %v651
        %v653 = vlaneseq
        %v654 = vshrl.u32 %v653, 7
        %v655 = vsub.s32 6, %v654
        %v656 = vrot.slane %v497, %v655
        %v657 = vmul.f32 %v647, %v652
        %v658 = vmul.f32 %v648, %v656
        %659 = vset.pattern.permute.xlu0 6
        %660 = vperm.xlu0 %659, %v495
        %v661 = vpop.permute.xlu0 %660
        %v663 = vmul.f32 %v657, %v661
        %v664 = vmul.f32 %v658, %v661
        %v665 = vadd.f32 %v640, %v663
        %v666 = vadd.f32 %v641, %v664
        %667 = vrot.lane.b32.xlu0 %v493, 112
        %v668 = vpop.permute.xlu0 %667
        %669 = vrot.lane.b32.xlu0 %v494, 112
        %v670 = vpop.permute.xlu0 %669
        %vm671 = vcmp.lt.s32.totalorder %v520, 112
        %v672 = vsel %vm671, %v668, %v670
        %v673 = vsel %vm671, %v670, %v668
        %v674 = vlaneseq
        %v675 = vshrl.u32 %v674, 7
        %v676 = vsub.s32 7, %v675
        %v677 = vrot.slane %v496, %v676
        %v678 = vlaneseq
        %v679 = vshrl.u32 %v678, 7
        %v680 = vsub.s32 7, %v679
        %v681 = vrot.slane %v497, %v680
        %v682 = vmul.f32 %v672, %v677
        %v683 = vmul.f32 %v673, %v681
        %684 = vset.pattern.permute.xlu0 7
        %685 = vperm.xlu0 %684, %v495
        %v686 = vpop.permute.xlu0 %685
        %v688 = vmul.f32 %v682, %v686
        %v689 = vmul.f32 %v683, %v686
        %v690 = vadd.f32 %v665, %v688
        %v691 = vadd.f32 %v666, %v689
        %692 = vrot.lane.b32.xlu0 %v493, 111
        %v693 = vpop.permute.xlu0 %692
        %694 = vrot.lane.b32.xlu0 %v494, 111
        %v695 = vpop.permute.xlu0 %694
        %vm696 = vcmp.lt.s32.totalorder %v520, 111
        %v697 = vsel %vm696, %v693, %v695
        %v698 = vsel %vm696, %v695, %v693
        %v699 = vlaneseq
        %v700 = vshrl.u32 %v699, 7
        %v701 = vsub.s32 0, %v700
        %v702 = vrot.slane %v498, %v701
        %v703 = vlaneseq
        %v704 = vshrl.u32 %v703, 7
        %v705 = vsub.s32 0, %v704
        %v706 = vrot.slane %v499, %v705
        %v707 = vmul.f32 %v697, %v702
        %v708 = vmul.f32 %v698, %v706
        %709 = vset.pattern.permute.xlu0 8
        %710 = vperm.xlu0 %709, %v495
        %v711 = vpop.permute.xlu0 %710
        %v713 = vmul.f32 %v707, %v711
        %v714 = vmul.f32 %v708, %v711
        %v715 = vadd.f32 %v690, %v713
        %v716 = vadd.f32 %v691, %v714
        %v717 = vmax.f32 %v715, 0.0
        %v718 = vmax.f32 %v716, 0.0
        %v719 = vmin.f32 %v717, 6.0
        %v720 = vmin.f32 %v718, 6.0
        %v721 = vld [vmem:[%s400] sm:$0xf]
        %vm722 = vcmask 64512
        %v724 = vsel %vm722, %v721, 0
        %726 = vmatprep.subr.mxu0 %v720
        %727 = vmatpush1.msra.mxu0 %v719
        %728 = vmatprep.subr.mxu0 0.0
        %729 = vmatpush1.msra.mxu0 0.0
        %730 = vmatprep.subr.mxu0 0.0
        %731 = vmatpush1.msra.mxu0 0.0
        %732 = vmatprep.subr.mxu0 0.0
        %733 = vmatpush1.msra.mxu0 0.0
        %734 = vmatprep.subr.mxu0 0.0
        %735 = vmatpush1.msra.mxu0 0.0
        %736 = vmatprep.subr.mxu0 0.0
        %737 = vmatpush1.msra.mxu0 0.0
        %738 = vmatprep.subr.mxu0 0.0
        %739 = vmatpush1.msra.mxu0 0.0
        %740 = vmatprep.subr.mxu0 0.0
        %741 = vmatpush1.msra.mxu0 0.0
        %742 = vmatprep.subr.mxu0 0.0
        %743 = vmatpush1.msra.mxu0 0.0
        %744 = vmatprep.subr.mxu0 0.0
        %745 = vmatpush1.msra.mxu0 0.0
        %746 = vmatprep.subr.mxu0 0.0
        %747 = vmatpush1.msra.mxu0 0.0
        %748 = vmatprep.subr.mxu0 0.0
        %749 = vmatpush1.msra.mxu0 0.0
        %750 = vmatprep.subr.mxu0 0.0
        %751 = vmatpush1.msra.mxu0 0.0
        %752 = vmatprep.subr.mxu0 0.0
        %753 = vmatpush1.msra.mxu0 0.0
        %754 = vmatprep.subr.mxu0 0.0
        %755 = vmatpush1.msra.mxu0 0.0
        %756 = vmatprep.subr.mxu0 0.0
        %757 = vmatpush1.msra.mxu0 0.0
        %758 = vmatprep.subr.mxu0 0.0
        %759 = vmatpush1.msra.mxu0 0.0
        %760 = vmatprep.subr.mxu0 0.0
        %761 = vmatpush1.msra.mxu0 0.0
        %762 = vmatprep.subr.mxu0 0.0
        %763 = vmatpush1.msra.mxu0 0.0
        %764 = vmatprep.subr.mxu0 0.0
        %765 = vmatpush1.msra.mxu0 0.0
        %766 = vmatprep.subr.mxu0 0.0
        %767 = vmatpush1.msra.mxu0 0.0
        %768 = vmatprep.subr.mxu0 0.0
        %769 = vmatpush1.msra.mxu0 0.0
        %770 = vmatprep.subr.mxu0 0.0
        %771 = vmatpush1.msra.mxu0 0.0
        %772 = vmatprep.subr.mxu0 0.0
        %773 = vmatpush1.msra.mxu0 0.0
        %774 = vmatprep.subr.mxu0 0.0
        %775 = vmatpush1.msra.mxu0 0.0
        %776 = vmatprep.subr.mxu0 0.0
        %777 = vmatpush1.msra.mxu0 0.0
        %778 = vmatprep.subr.mxu0 0.0
        %779 = vmatpush1.msra.mxu0 0.0
        %780 = vmatprep.subr.mxu0 0.0
        %781 = vmatpush1.msra.mxu0 0.0
        %782 = vmatprep.subr.mxu0 0.0
        %783 = vmatpush1.msra.mxu0 0.0
        %784 = vmatprep.subr.mxu0 0.0
        %785 = vmatpush1.msra.mxu0 0.0
        %786 = vmatprep.subr.mxu0 0.0
        %787 = vmatpush1.msra.mxu0 0.0
        %788 = vmatprep.subr.mxu0 0.0
        %789 = vmatpush1.msra.mxu0 0.0
        %790 = vmatprep.mubr.f32.mxu0 0.0
        %791 = vmatmul.mubr.f32.gmra.mrb[0].mxu0 %v724
        %v792 = vpop.f32.mrb[0].mxu0
        %v793 = vadd.f32 0.0, %v792
        %v794 = vpop.f32.mrb[0].mxu0
        %v795 = vadd.f32 0.0, %v794
        %796 = vdwg.mxu0
        %p797 = scmp.eq.s32.totalorder %s27, 0
        // Predicated region
        $region53: #{tpu_custom_call.1} parent=51 // pred_check
          %p798 = pneg %p797
        $region54: #{tpu_custom_call.1} parent=51 // pred_check_branch
          %800 = sbr.rel (%p798) target = $region56
        $region55: #{tpu_custom_call.1} parent=51 // pred_region
          %v803 = vcombine.low %v793, %v795
          %805 = vst [vmem:[#allocation2] sm:$0xff] %v803
        $region56: #{tpu_custom_call.1} parent=51 // pred_fallthru
          _
        %p806 = scmp.gt.s32.totalorder %s27, 0
        // Predicated region
        $region57: #{tpu_custom_call.1} parent=51 // pred_check
          %p807 = pneg %p806
        $region58: #{tpu_custom_call.1} parent=51 // pred_check_branch
          %809 = sbr.rel (%p807) target = $region60
        $region59: #{tpu_custom_call.1} parent=51 // pred_region
          %v810 = vld [vmem:[#allocation2] sm:$0xff]
          %v813 = vcombine.low %v793, %v795
          %v815 = vadd.f32 %v810, %v813
          %816 = vst [vmem:[#allocation2] sm:$0xff] %v815
        $region60: #{tpu_custom_call.1} parent=51 // pred_fallthru
          _
        %p817 = scmp.eq.s32.totalorder %s27, 1
        // Predicated region
        $region61: #{tpu_custom_call.1} parent=51 // pred_check
          %p818 = pneg %p817
        $region62: #{tpu_custom_call.1} parent=51 // pred_check_branch
          %820 = sbr.rel (%p818) target = $region64
        $region63: #{tpu_custom_call.1} parent=51 // pred_region
          %v821 = vld [vmem:[#allocation2] sm:$0xff]
          %v822 = vld [vmem:[%s6] sm:$0xf]
          %824 = vset.pattern.permute.xlu0 0
          %825 = vperm.xlu0 %824, %v822
          %v826 = vpop.permute.xlu0 %825
          %v828 = vunpack.c.l.s4 839922192
          %v829 = vunpack.c.0.s8 %v828
          %v830 = vlaneseq
          %v831 = vshrl.u32 %v830, 7
          %v832 = vsub.s32 %v829, %v831
          %v833 = vrot.slane %v826, %v832
          %v835 = vadd.f32 %v821, %v833
          %v836 = vadd.f32 %v835, %v401
          %837 = vst [vmem:[%s375] sm:$0xff] %v836
        $region64: #{tpu_custom_call.1} parent=51 // pred_fallthru
          _
        %s838 = sand.u32 %s240, 1
        %s839 = scalar_lea.sflag [#allocation4], %s838
        %s840 = sand.u32 %s240, 1
        %s841 = smul.addr %s840, 8
        %s842 = scalar_lea.vmem [#allocation3], %s841
        // Predicated region
        $region65: #{tpu_custom_call.1} parent=51 // pred_check
          %p843 = pneg %p250
        $region66: #{tpu_custom_call.1} parent=51 // pred_check_branch
          %845 = sbr.rel (%p843) target = $region68
        $region67: #{tpu_custom_call.1} parent=51 // pred_region
          %s847 = ssub.s32 128, 128
          %848 = vsyncadd %s839, %s847
          %s849 = smul.addr %s26, 2
          %s850 = smul.addr %s849, 64
          %s851 = scalar_lea.hbm %s8, %s850
          %s853 = sshll.u32 %s842, 4
          %s854 = int_to_ptr.vmem [resolvable:$true] %s853
          %856 = dma.vmem_to_hbm [thread:$0]  %s854, 128, %s851, %s839
        $region68: #{tpu_custom_call.1} parent=51 // pred_fallthru
          _
      $region52: #{tpu_custom_call.1} parent=5 // pred_fallthru
        _
      %p857 = scmp.le.s32.totalorder 2, %s17
      // Predicated region
      $region69: #{tpu_custom_call.1} parent=5 // pred_check
        %p858 = pneg %p857
      $region70: #{tpu_custom_call.1} parent=5 // pred_check_branch
        %860 = sbr.rel (%p858) target = $region72
      $region71: #{tpu_custom_call.1} parent=5 // pred_region
        %s861 = ssub.s32 %s17, 2
        // Predicated region
        $region73: #{tpu_custom_call.1} parent=71 // pred_check
          %p862 = pneg %p256
        $region74: #{tpu_custom_call.1} parent=71 // pred_check_branch
          %864 = sbr.rel (%p862) target = $region76
        $region75: #{tpu_custom_call.1} parent=71 // pred_region
          %s865 = sand.u32 %s241, 1
          %s866 = scalar_lea.sflag [#allocation4], %s865
          %s867 = sand.u32 %s241, 1
          %s868 = smul.addr %s867, 8
          %s869 = scalar_lea.vmem [#allocation3], %s868
          %870 = dma.done %s866, 128
        $region76: #{tpu_custom_call.1} parent=71 // pred_fallthru
          _
      $region72: #{tpu_custom_call.1} parent=5 // pred_fallthru
        _
    $region6: #{tpu_custom_call.1} parent=1 // loop_footer
      %s21 = sadd.s32 1, %s17
    $region7: #{tpu_custom_call.1} parent=1 // loop_footer_branch
      %16 = sbr.rel target = $region3
    $region8: #{tpu_custom_call.1} parent=1 // loop_exit
      _
    %871 = vsyncpa [#allocation4], 1
    %s872 = scalar_lea.sflag [#allocation4], 1
    %873 = vsyncpa %s872, 1

</llo_original>
